<compile_context>
chip_gen: v7x
topology: tpu7x:2x2x1
jax: 0.10.0
libtpu: 0.0.40
codegen_flags: <defaults>
</compile_context>

<pallas_src>
import functools

import jax
import jax.numpy as jnp
from jax.experimental import pallas as pl
from jax.experimental.pallas import tpu as pltpu


_ROWS = 8  # f32 sublane tile; row 0 carries the real sample, rows 1..7 are padding.


def _round_up(x, m):
    return ((x + m - 1) // m) * m


def _sigmoid(z):
    # Explicit form so lowering only needs exp (EUP) + add/div (VPU).
    return 1.0 / (1.0 + jnp.exp(-z))


def _dnn_kernel(dp, hp, np_, x_ref, vec_ref, w1_ref, w2_ref, w3_ref, o_ref):
    # Packed per-lane vectors (static, lane-aligned slices of the (8, Vp) block):
    cf = vec_ref[0:1, :dp]      # cat(conn, conn)                (Wrapping_Layers_Input diag)
    b1 = vec_ref[1:2, :hp]      # LinLayer1 bias
    b2 = vec_ref[2:3, :hp]      # LinLayer2 bias
    conn2 = vec_ref[3:4, :np_]  # conn * conn   (bias_layer diag * output-wrap diag)
    cbias = vec_ref[4:5, :np_]  # conn * bias_w (output-wrap diag * bias_layer bias)
    smask = vec_ref[5:6, :np_]  # 0 on valid lanes, -1e30 on padded lanes

    # Wrapping_Layers_Input: diag(cat(conn, conn)) @ x == elementwise multiply.
    xw = x_ref[...] * cf                                                  # (R, Dp)

    # LinLayer1 + sigmoid, LinLayer2 + sigmoid (weights stored transposed).
    h = _sigmoid(jnp.dot(xw, w1_ref[...],
                         preferred_element_type=jnp.float32) + b1)       # (R, Hp)
    h = _sigmoid(jnp.dot(h, w2_ref[...],
                         preferred_element_type=jnp.float32) + b2)       # (R, Hp)

    # LinLayer3 (no bias) -> logits; additive mask kills the padded lanes.
    logits = jnp.dot(h, w3_ref[...],
                     preferred_element_type=jnp.float32) + smask         # (R, Np)

    # softmax over the N valid lanes.
    m = jnp.max(logits, axis=-1, keepdims=True)
    e = jnp.exp(logits - m)
    s = e * pl.reciprocal(jnp.sum(e, axis=-1, keepdims=True), approx=True)

    # bias_layer then Wrapping_Layers_Output, folded: conn*(conn*s + bias_w).
    y = conn2 * s + cbias

    # NormalizationLayer: relu then divide by the total sum.
    r = jnp.maximum(y, 0.0)
    o_ref[...] = r * pl.reciprocal(jnp.sum(r, axis=-1, keepdims=True), approx=True)


def simple_period_dnn_forward(x, conn, w1, b1, w2, b2, w3, bias_w):
    """Forward of Simple_Period_DNN.

    x: (D,), conn: (D//2,), w1: (30, D), b1: (30,), w2: (30, 30), b2: (30,),
    w3: (D//2, 30), bias_w: (D//2,).  Returns float32 (D//2,).
    """
    D = x.shape[0]
    N = D // 2
    H = w1.shape[0]
    Dp = _round_up(D, 128)
    Hp = _round_up(H, 128)
    Np = _round_up(N, 128)
    Vp = max(Dp, Hp, Np)
    f32 = jnp.float32

    def pad_mat(a, rows, cols):
        return jnp.zeros((rows, cols), f32).at[:a.shape[0], :a.shape[1]].set(a.astype(f32))

    # Row-padded input sample (row 0 real, rows 1..7 zero padding).
    x_p = jnp.zeros((_ROWS, Dp), f32).at[0, :D].set(x.astype(f32))

    # All small per-lane vectors packed into one lane-dense (8, Vp) operand.
    conn_f = conn.astype(f32)
    vecs = jnp.zeros((_ROWS, Vp), f32)
    vecs = vecs.at[0, :D].set(jnp.concatenate([conn_f, conn_f]))     # input-wrap diag
    vecs = vecs.at[1, :H].set(b1.astype(f32))
    vecs = vecs.at[2, :H].set(b2.astype(f32))
    vecs = vecs.at[3, :N].set(conn_f * conn_f)                       # conn^2
    vecs = vecs.at[4, :N].set(conn_f * bias_w.astype(f32))           # conn * bias_w
    vecs = vecs.at[5, :Np].set(jnp.full((Np,), -1e30, f32))          # softmax mask ...
    vecs = vecs.at[5, :N].set(jnp.zeros((N,), f32))                  # ... 0 on valid lanes

    # Weights stored transposed so the kernel does (rows, K) @ (K, out) on the MXU.
    w1t_p = pad_mat(w1.T, Dp, Hp)
    w2t_p = pad_mat(w2.T, Hp, Hp)
    w3t_p = pad_mat(w3.T, Hp, Np)

    vmem = pl.BlockSpec(memory_space=pltpu.MemorySpace.VMEM)
    out = pl.pallas_call(
        functools.partial(_dnn_kernel, Dp, Hp, Np),
        out_shape=jax.ShapeDtypeStruct((_ROWS, Np), f32),
        in_specs=[vmem] * 5,
        out_specs=vmem,
    )(x_p, vecs, w1t_p, w2t_p, w3t_p)

    return out[0, :N]


if __name__ == "__main__":
    key = jax.random.PRNGKey(0)
    ks = jax.random.split(key, 8)

    D = 32                 # Inputs (even); N = Inputs // 2 = 16; hidden = 30 (fixed by module)
    N = D // 2
    H = 30

    x = jax.random.normal(ks[0], (D,), jnp.float32)
    # Deterministic 0/1 connectivity vector (has both connected and disconnected nodes).
    conn = jnp.array([1., 1., 0., 1., 1., 1., 0., 1., 1., 0., 1., 1., 1., 1., 0., 1.],
                     dtype=jnp.float32)
    w1 = jax.random.normal(ks[2], (H, D), jnp.float32) * 0.3
    b1 = jax.random.normal(ks[3], (H,), jnp.float32) * 0.1
    w2 = jax.random.normal(ks[4], (H, H), jnp.float32) * 0.3
    b2 = jax.random.normal(ks[5], (H,), jnp.float32) * 0.1
    w3 = jax.random.normal(ks[6], (N, H), jnp.float32) * 0.3
    bias_w = 0.1 * jnp.abs(jax.random.normal(ks[7], (N,), jnp.float32))

    fwd = jax.jit(simple_period_dnn_forward)
    out = jax.block_until_ready(fwd(x, conn, w1, b1, w2, b2, w3, bias_w))

    # Pure-JAX reference of the PyTorch forward.
    def ref_forward(x):
        cf = jnp.concatenate([conn, conn])
        h = x * cf
        h = jax.nn.sigmoid(h @ w1.T + b1)
        h = jax.nn.sigmoid(h @ w2.T + b2)
        logits = h @ w3.T
        s = jax.nn.softmax(logits, axis=0)
        y = conn * (conn * s + bias_w)
        r = jnp.maximum(y, 0.0)
        return r / jnp.sum(r)

    expected = ref_forward(x)
    assert out.shape == (N,), out.shape
    assert bool(jnp.all(jnp.isfinite(out))), "non-finite output"
    assert jnp.allclose(out, expected, atol=2e-3), (out, expected)

    print("KERNEL_OK")
</pallas_src>

<mosaic_0001>
module attributes {stable_mosaic.version = 11 : i64} {
  func.func @_dnn_kernel(%arg0: memref<8x128xf32, #tpu.memory_space<vmem>>, %arg1: memref<8x128xf32, #tpu.memory_space<vmem>>, %arg2: memref<128x128xf32, #tpu.memory_space<vmem>>, %arg3: memref<128x128xf32, #tpu.memory_space<vmem>>, %arg4: memref<128x128xf32, #tpu.memory_space<vmem>>, %arg5: memref<8x128xf32, #tpu.memory_space<vmem>>) attributes {dimension_semantics = [], scalar_prefetch = 0 : i64, scratch_operands = 0 : i64, tpu.core_type = #tpu.core_type<tc>} {
    %c0 = arith.constant 0 : index
    %c0_0 = arith.constant 0 : index
    %0 = vector.load %arg1[%c0, %c0_0] : memref<8x128xf32, #tpu.memory_space<vmem>>, vector<1x128xf32>
    %c1 = arith.constant 1 : index
    %c0_1 = arith.constant 0 : index
    %1 = vector.load %arg1[%c1, %c0_1] : memref<8x128xf32, #tpu.memory_space<vmem>>, vector<1x128xf32>
    %c2 = arith.constant 2 : index
    %c0_2 = arith.constant 0 : index
    %2 = vector.load %arg1[%c2, %c0_2] : memref<8x128xf32, #tpu.memory_space<vmem>>, vector<1x128xf32>
    %c3 = arith.constant 3 : index
    %c0_3 = arith.constant 0 : index
    %3 = vector.load %arg1[%c3, %c0_3] : memref<8x128xf32, #tpu.memory_space<vmem>>, vector<1x128xf32>
    %c4 = arith.constant 4 : index
    %c0_4 = arith.constant 0 : index
    %4 = vector.load %arg1[%c4, %c0_4] : memref<8x128xf32, #tpu.memory_space<vmem>>, vector<1x128xf32>
    %c5 = arith.constant 5 : index
    %c0_5 = arith.constant 0 : index
    %5 = vector.load %arg1[%c5, %c0_5] : memref<8x128xf32, #tpu.memory_space<vmem>>, vector<1x128xf32>
    %c0_6 = arith.constant 0 : index
    %c0_7 = arith.constant 0 : index
    %6 = vector.load %arg0[%c0_6, %c0_7] : memref<8x128xf32, #tpu.memory_space<vmem>>, vector<8x128xf32>
    %7 = vector.broadcast %0 : vector<1x128xf32> to vector<8x128xf32>
    %8 = arith.mulf %6, %7 : vector<8x128xf32>
    %c0_8 = arith.constant 0 : index
    %c0_9 = arith.constant 0 : index
    %9 = vector.load %arg2[%c0_8, %c0_9] : memref<128x128xf32, #tpu.memory_space<vmem>>, vector<128x128xf32>
    %cst = arith.constant dense<0.000000e+00> : vector<8x128xf32>
    %10 = tpu.matmul %8, %9, %cst {dimension_numbers = #tpu.dot_dimension_numbers<[1], [0], [0], [1], [0, 0, 1, 1], [], []>} : vector<8x128xf32>, vector<128x128xf32>, vector<8x128xf32> -> vector<8x128xf32>
    %11 = vector.broadcast %1 : vector<1x128xf32> to vector<8x128xf32>
    %12 = arith.addf %10, %11 : vector<8x128xf32>
    %cst_10 = arith.constant 0.000000e+00 : f32
    %13 = vector.broadcast %cst_10 : f32 to vector<8x128xf32>
    %14 = arith.subf %13, %12 : vector<8x128xf32>
    %15 = math.exp %14 : vector<8x128xf32>
    %cst_11 = arith.constant 1.000000e+00 : f32
    %16 = vector.broadcast %cst_11 : f32 to vector<8x128xf32>
    %17 = arith.addf %16, %15 : vector<8x128xf32>
    %cst_12 = arith.constant 1.000000e+00 : f32
    %18 = vector.broadcast %cst_12 : f32 to vector<8x128xf32>
    %19 = arith.divf %18, %17 : vector<8x128xf32>
    %c0_13 = arith.constant 0 : index
    %c0_14 = arith.constant 0 : index
    %20 = vector.load %arg3[%c0_13, %c0_14] : memref<128x128xf32, #tpu.memory_space<vmem>>, vector<128x128xf32>
    %cst_15 = arith.constant dense<0.000000e+00> : vector<8x128xf32>
    %21 = tpu.matmul %19, %20, %cst_15 {dimension_numbers = #tpu.dot_dimension_numbers<[1], [0], [0], [1], [0, 0, 1, 1], [], []>} : vector<8x128xf32>, vector<128x128xf32>, vector<8x128xf32> -> vector<8x128xf32>
    %22 = vector.broadcast %2 : vector<1x128xf32> to vector<8x128xf32>
    %23 = arith.addf %21, %22 : vector<8x128xf32>
    %cst_16 = arith.constant 0.000000e+00 : f32
    %24 = vector.broadcast %cst_16 : f32 to vector<8x128xf32>
    %25 = arith.subf %24, %23 : vector<8x128xf32>
    %26 = math.exp %25 : vector<8x128xf32>
    %cst_17 = arith.constant 1.000000e+00 : f32
    %27 = vector.broadcast %cst_17 : f32 to vector<8x128xf32>
    %28 = arith.addf %27, %26 : vector<8x128xf32>
    %cst_18 = arith.constant 1.000000e+00 : f32
    %29 = vector.broadcast %cst_18 : f32 to vector<8x128xf32>
    %30 = arith.divf %29, %28 : vector<8x128xf32>
    %c0_19 = arith.constant 0 : index
    %c0_20 = arith.constant 0 : index
    %31 = vector.load %arg4[%c0_19, %c0_20] : memref<128x128xf32, #tpu.memory_space<vmem>>, vector<128x128xf32>
    %cst_21 = arith.constant dense<0.000000e+00> : vector<8x128xf32>
    %32 = tpu.matmul %30, %31, %cst_21 {dimension_numbers = #tpu.dot_dimension_numbers<[1], [0], [0], [1], [0, 0, 1, 1], [], []>} : vector<8x128xf32>, vector<128x128xf32>, vector<8x128xf32> -> vector<8x128xf32>
    %33 = vector.broadcast %5 : vector<1x128xf32> to vector<8x128xf32>
    %34 = arith.addf %32, %33 : vector<8x128xf32>
    %cst_22 = arith.constant dense<0xFF800000> : vector<8xf32>
    %35 = vector.multi_reduction <maximumf>, %34, %cst_22 [1] : vector<8x128xf32> to vector<8xf32>
    %36 = vector.shape_cast %35 : vector<8xf32> to vector<8x1xf32>
    %37 = vector.broadcast %36 : vector<8x1xf32> to vector<8x128xf32>
    %38 = arith.subf %34, %37 : vector<8x128xf32>
    %39 = math.exp %38 : vector<8x128xf32>
    %cst_23 = arith.constant dense<0.000000e+00> : vector<8xf32>
    %40 = vector.multi_reduction <add>, %39, %cst_23 [1] : vector<8x128xf32> to vector<8xf32>
    %41 = vector.shape_cast %40 : vector<8xf32> to vector<8x1xf32>
    %42 = tpu.reciprocal %41 {approx = true} : vector<8x1xf32> -> vector<8x1xf32>
    %43 = vector.broadcast %42 : vector<8x1xf32> to vector<8x128xf32>
    %44 = arith.mulf %39, %43 : vector<8x128xf32>
    %45 = vector.broadcast %3 : vector<1x128xf32> to vector<8x128xf32>
    %46 = arith.mulf %45, %44 : vector<8x128xf32>
    %47 = vector.broadcast %4 : vector<1x128xf32> to vector<8x128xf32>
    %48 = arith.addf %46, %47 : vector<8x128xf32>
    %cst_24 = arith.constant 0.000000e+00 : f32
    %49 = vector.broadcast %cst_24 : f32 to vector<8x128xf32>
    %50 = arith.maximumf %48, %49 : vector<8x128xf32>
    %cst_25 = arith.constant dense<0.000000e+00> : vector<8xf32>
    %51 = vector.multi_reduction <add>, %50, %cst_25 [1] : vector<8x128xf32> to vector<8xf32>
    %52 = vector.shape_cast %51 : vector<8xf32> to vector<8x1xf32>
    %53 = tpu.reciprocal %52 {approx = true} : vector<8x1xf32> -> vector<8x1xf32>
    %54 = vector.broadcast %53 : vector<8x1xf32> to vector<8x128xf32>
    %55 = arith.mulf %50, %54 : vector<8x128xf32>
    %c0_26 = arith.constant 0 : index
    %c0_27 = arith.constant 0 : index
    %56 = vector.load %arg5[%c0_26, %c0_27] : memref<8x128xf32, #tpu.memory_space<vmem>>, vector<8x128xf32>
    tpu.vector_store %arg5[%c0_26, %c0_27], %55 {strides = array<i32>} : memref<8x128xf32, #tpu.memory_space<vmem>>, vector<8x128xf32>,
    return
  }
}

</mosaic_0001>

<llo_original>
// kernel: simple_period_dnn_forward.1
$region0: #{simple_period_dnn_forward.1}
  #allocation0 [shape = 'u32[]', space=smem, size = 0x4, offset = 0x4, fixed_abs, tag = 'smem constant byte address 0x4 - core index']
  #allocation1 [shape = 'u32[144,128]{1,0:T(1,128)}', space=vmem, size = 0x12000, scoped, tag = 'internal scratch']
  %s0 = inlined_call_operand.vmem [shape: f32[8,128], index: 0, kind: input, shape index: {}]
  %s1 = inlined_call_operand.vmem [shape: f32[8,128], index: 1, kind: input, shape index: {}]
  %s2 = inlined_call_operand.vmem [shape: f32[128,128], index: 2, kind: input, shape index: {}]
  %s3 = inlined_call_operand.vmem [shape: f32[128,128], index: 3, kind: input, shape index: {}]
  %s4 = inlined_call_operand.vmem [shape: f32[128,128], index: 4, kind: input, shape index: {}]
  %s5 = inlined_call_operand.vmem [shape: f32[8,128], index: 5, kind: output, shape index: {}]
  %s6 = sld [smem:[#allocation0]]
  $region30: #{simple_period_dnn_forward.1} parent=0
    _
  %s8 = ssub.s32 1, %s6
  %s9 = scalar_select 0, %s8, %s6
  // Predicated region
  $region2: #{simple_period_dnn_forward.1} parent=0 // pred_check
    _
  $region3: #{simple_period_dnn_forward.1} parent=0 // pred_check_branch
    %11 = sbr.rel (0) target = $region5
  $region4: #{simple_period_dnn_forward.1} parent=0 // pred_region
    _
  $region5: #{simple_period_dnn_forward.1} parent=0 // pred_fallthru
    _
  // Predicated region
  $region6: #{simple_period_dnn_forward.1} parent=0 // pred_check
    _
  $region7: #{simple_period_dnn_forward.1} parent=0 // pred_check_branch
    %13 = sbr.rel (0) target = $region9
  $region8: #{simple_period_dnn_forward.1} parent=0 // pred_region
    _
  $region9: #{simple_period_dnn_forward.1} parent=0 // pred_fallthru
    _
  // Predicated region
  $region10: #{simple_period_dnn_forward.1} parent=0 // pred_check
    _
  $region11: #{simple_period_dnn_forward.1} parent=0 // pred_check_branch
    %15 = sbr.rel (0) target = $region13
  $region12: #{simple_period_dnn_forward.1} parent=0 // pred_region
    _
  $region13: #{simple_period_dnn_forward.1} parent=0 // pred_fallthru
    _
  // Predicated region
  $region14: #{simple_period_dnn_forward.1} parent=0 // pred_check
    _
  $region15: #{simple_period_dnn_forward.1} parent=0 // pred_check_branch
    %17 = sbr.rel (0) target = $region17
  $region16: #{simple_period_dnn_forward.1} parent=0 // pred_region
    _
  $region17: #{simple_period_dnn_forward.1} parent=0 // pred_fallthru
    _
  // Predicated region
  $region18: #{simple_period_dnn_forward.1} parent=0 // pred_check
    _
  $region19: #{simple_period_dnn_forward.1} parent=0 // pred_check_branch
    %19 = sbr.rel (0) target = $region21
  $region20: #{simple_period_dnn_forward.1} parent=0 // pred_region
    _
  $region21: #{simple_period_dnn_forward.1} parent=0 // pred_fallthru
    _
  %v20 = vld [vmem:[%s1] sm:$0x1]
  %v21 = vld [vmem:[%s1 + $0x1] sm:$0x1]
  %v22 = vld [vmem:[%s1 + $0x2] sm:$0x1]
  %v23 = vld [vmem:[%s1 + $0x3] sm:$0x1]
  %v24 = vld [vmem:[%s1 + $0x4] sm:$0x1]
  %v25 = vld [vmem:[%s1 + $0x5] sm:$0x1]
  %v26 = vld [vmem:[%s0] sm:$0xff]
  %v27 = vlaneseq
  %v28 = vshrl.u32 %v27, 7
  %v29 = vsub.s32 0, %v28
  %v30 = vrot.slane %v20, %v29
  %v31 = vmul.f32 %v26, %v30
  %v32 = vld [vmem:[%s2] sm:$0xff]
  %v33 = vld [vmem:[%s2 + $0x8] sm:$0xff]
  %v34 = vld [vmem:[%s2 + $0x10] sm:$0xff]
  %v35 = vld [vmem:[%s2 + $0x18] sm:$0xff]
  %v36 = vld [vmem:[%s2 + $0x20] sm:$0xff]
  %v37 = vld [vmem:[%s2 + $0x28] sm:$0xff]
  %v38 = vld [vmem:[%s2 + $0x30] sm:$0xff]
  %v39 = vld [vmem:[%s2 + $0x38] sm:$0xff]
  %v40 = vld [vmem:[%s2 + $0x40] sm:$0xff]
  %v41 = vld [vmem:[%s2 + $0x48] sm:$0xff]
  %v42 = vld [vmem:[%s2 + $0x50] sm:$0xff]
  %v43 = vld [vmem:[%s2 + $0x58] sm:$0xff]
  %v44 = vld [vmem:[%s2 + $0x60] sm:$0xff]
  %v45 = vld [vmem:[%s2 + $0x68] sm:$0xff]
  %v46 = vld [vmem:[%s2 + $0x70] sm:$0xff]
  %v47 = vld [vmem:[%s2 + $0x78] sm:$0xff]
  %v48 = vlaneseq
  %v49 = vshrl.u32 %v48, 7
  %v50 = vsub.s32 0, %v49
  %v51 = vrot.slane %v21, %v50
  %52 = vmatprep.subr.mxu0 0.0
  %53 = vmatpush1.msra.mxu0 %v32
  %54 = vmatprep.subr.mxu0 0.0
  %55 = vmatpush1.msra.mxu0 %v33
  %56 = vmatprep.subr.mxu0 0.0
  %57 = vmatpush1.msra.mxu0 %v34
  %58 = vmatprep.subr.mxu0 0.0
  %59 = vmatpush1.msra.mxu0 %v35
  %60 = vmatprep.subr.mxu0 0.0
  %61 = vmatpush1.msra.mxu0 %v36
  %62 = vmatprep.subr.mxu0 0.0
  %63 = vmatpush1.msra.mxu0 %v37
  %64 = vmatprep.subr.mxu0 0.0
  %65 = vmatpush1.msra.mxu0 %v38
  %66 = vmatprep.subr.mxu0 0.0
  %67 = vmatpush1.msra.mxu0 %v39
  %68 = vmatprep.subr.mxu0 0.0
  %69 = vmatpush1.msra.mxu0 %v40
  %70 = vmatprep.subr.mxu0 0.0
  %71 = vmatpush1.msra.mxu0 %v41
  %72 = vmatprep.subr.mxu0 0.0
  %73 = vmatpush1.msra.mxu0 %v42
  %74 = vmatprep.subr.mxu0 0.0
  %75 = vmatpush1.msra.mxu0 %v43
  %76 = vmatprep.subr.mxu0 0.0
  %77 = vmatpush1.msra.mxu0 %v44
  %78 = vmatprep.subr.mxu0 0.0
  %79 = vmatpush1.msra.mxu0 %v45
  %80 = vmatprep.subr.mxu0 0.0
  %81 = vmatpush1.msra.mxu0 %v46
  %82 = vmatprep.subr.mxu0 0.0
  %83 = vmatpush1.msra.mxu0 %v47
  %84 = vmatprep.subr.mxu0 0.0
  %85 = vmatpush1.msra.mxu0 0.0
  %86 = vmatprep.subr.mxu0 0.0
  %87 = vmatpush1.msra.mxu0 0.0
  %88 = vmatprep.subr.mxu0 0.0
  %89 = vmatpush1.msra.mxu0 0.0
  %90 = vmatprep.subr.mxu0 0.0
  %91 = vmatpush1.msra.mxu0 0.0
  %92 = vmatprep.subr.mxu0 0.0
  %93 = vmatpush1.msra.mxu0 0.0
  %94 = vmatprep.subr.mxu0 0.0
  %95 = vmatpush1.msra.mxu0 0.0
  %96 = vmatprep.subr.mxu0 0.0
  %97 = vmatpush1.msra.mxu0 0.0
  %98 = vmatprep.subr.mxu0 0.0
  %99 = vmatpush1.msra.mxu0 0.0
  %100 = vmatprep.subr.mxu0 0.0
  %101 = vmatpush1.msra.mxu0 0.0
  %102 = vmatprep.subr.mxu0 0.0
  %103 = vmatpush1.msra.mxu0 0.0
  %104 = vmatprep.subr.mxu0 0.0
  %105 = vmatpush1.msra.mxu0 0.0
  %106 = vmatprep.subr.mxu0 0.0
  %107 = vmatpush1.msra.mxu0 0.0
  %108 = vmatprep.subr.mxu0 0.0
  %109 = vmatpush1.msra.mxu0 0.0
  %110 = vmatprep.subr.mxu0 0.0
  %111 = vmatpush1.msra.mxu0 0.0
  %112 = vmatprep.subr.mxu0 0.0
  %113 = vmatpush1.msra.mxu0 0.0
  %114 = vmatprep.subr.mxu0 0.0
  %115 = vmatpush1.msra.mxu0 0.0
  %116 = vmatprep.mubr.f32.mxu0 0.0
  %117 = vmatmul.mubr.f32.gmra.mrb[0].mxu0 %v31
  %v118 = vpop.f32.mrb[0].mxu0
  %v119 = vadd.f32 %v51, %v118
  %v120 = vpop.f32.mrb[0].mxu0
  %121 = vdwg.mxu0
  %v122 = vsub.f32 0.0, %v119
  %v123 = vmul.f32 %v122, 1.442695
  %v124 = vpow.pop %v123
  %v125 = vadd.f32 %v124, 1.0
  %v126 = vrcp.pop %v125
  %v127 = vmul.f32 1.0, %v126
  %v128 = vld [vmem:[%s3] sm:$0xff]
  %v129 = vld [vmem:[%s3 + $0x8] sm:$0xff]
  %v130 = vld [vmem:[%s3 + $0x10] sm:$0xff]
  %v131 = vld [vmem:[%s3 + $0x18] sm:$0xff]
  %v132 = vld [vmem:[%s3 + $0x20] sm:$0xff]
  %v133 = vld [vmem:[%s3 + $0x28] sm:$0xff]
  %v134 = vld [vmem:[%s3 + $0x30] sm:$0xff]
  %v135 = vld [vmem:[%s3 + $0x38] sm:$0xff]
  %v136 = vld [vmem:[%s3 + $0x40] sm:$0xff]
  %v137 = vld [vmem:[%s3 + $0x48] sm:$0xff]
  %v138 = vld [vmem:[%s3 + $0x50] sm:$0xff]
  %v139 = vld [vmem:[%s3 + $0x58] sm:$0xff]
  %v140 = vld [vmem:[%s3 + $0x60] sm:$0xff]
  %v141 = vld [vmem:[%s3 + $0x68] sm:$0xff]
  %v142 = vld [vmem:[%s3 + $0x70] sm:$0xff]
  %v143 = vld [vmem:[%s3 + $0x78] sm:$0xff]
  %v144 = vlaneseq
  %v145 = vshrl.u32 %v144, 7
  %v146 = vsub.s32 0, %v145
  %v147 = vrot.slane %v22, %v146
  %148 = vmatprep.subr.mxu0 0.0
  %149 = vmatpush1.msra.mxu0 %v128
  %150 = vmatprep.subr.mxu0 0.0
  %151 = vmatpush1.msra.mxu0 %v129
  %152 = vmatprep.subr.mxu0 0.0
  %153 = vmatpush1.msra.mxu0 %v130
  %154 = vmatprep.subr.mxu0 0.0
  %155 = vmatpush1.msra.mxu0 %v131
  %156 = vmatprep.subr.mxu0 0.0
  %157 = vmatpush1.msra.mxu0 %v132
  %158 = vmatprep.subr.mxu0 0.0
  %159 = vmatpush1.msra.mxu0 %v133
  %160 = vmatprep.subr.mxu0 0.0
  %161 = vmatpush1.msra.mxu0 %v134
  %162 = vmatprep.subr.mxu0 0.0
  %163 = vmatpush1.msra.mxu0 %v135
  %164 = vmatprep.subr.mxu0 0.0
  %165 = vmatpush1.msra.mxu0 %v136
  %166 = vmatprep.subr.mxu0 0.0
  %167 = vmatpush1.msra.mxu0 %v137
  %168 = vmatprep.subr.mxu0 0.0
  %169 = vmatpush1.msra.mxu0 %v138
  %170 = vmatprep.subr.mxu0 0.0
  %171 = vmatpush1.msra.mxu0 %v139
  %172 = vmatprep.subr.mxu0 0.0
  %173 = vmatpush1.msra.mxu0 %v140
  %174 = vmatprep.subr.mxu0 0.0
  %175 = vmatpush1.msra.mxu0 %v141
  %176 = vmatprep.subr.mxu0 0.0
  %177 = vmatpush1.msra.mxu0 %v142
  %178 = vmatprep.subr.mxu0 0.0
  %179 = vmatpush1.msra.mxu0 %v143
  %180 = vmatprep.subr.mxu0 0.0
  %181 = vmatpush1.msra.mxu0 0.0
  %182 = vmatprep.subr.mxu0 0.0
  %183 = vmatpush1.msra.mxu0 0.0
  %184 = vmatprep.subr.mxu0 0.0
  %185 = vmatpush1.msra.mxu0 0.0
  %186 = vmatprep.subr.mxu0 0.0
  %187 = vmatpush1.msra.mxu0 0.0
  %188 = vmatprep.subr.mxu0 0.0
  %189 = vmatpush1.msra.mxu0 0.0
  %190 = vmatprep.subr.mxu0 0.0
  %191 = vmatpush1.msra.mxu0 0.0
  %192 = vmatprep.subr.mxu0 0.0
  %193 = vmatpush1.msra.mxu0 0.0
  %194 = vmatprep.subr.mxu0 0.0
  %195 = vmatpush1.msra.mxu0 0.0
  %196 = vmatprep.subr.mxu0 0.0
  %197 = vmatpush1.msra.mxu0 0.0
  %198 = vmatprep.subr.mxu0 0.0
  %199 = vmatpush1.msra.mxu0 0.0
  %200 = vmatprep.subr.mxu0 0.0
  %201 = vmatpush1.msra.mxu0 0.0
  %202 = vmatprep.subr.mxu0 0.0
  %203 = vmatpush1.msra.mxu0 0.0
  %204 = vmatprep.subr.mxu0 0.0
  %205 = vmatpush1.msra.mxu0 0.0
  %206 = vmatprep.subr.mxu0 0.0
  %207 = vmatpush1.msra.mxu0 0.0
  %208 = vmatprep.subr.mxu0 0.0
  %209 = vmatpush1.msra.mxu0 0.0
  %210 = vmatprep.subr.mxu0 0.0
  %211 = vmatpush1.msra.mxu0 0.0
  %212 = vmatprep.mubr.f32.mxu0 0.0
  %213 = vmatmul.mubr.f32.gmra.mrb[0].mxu0 %v127
  %v214 = vpop.f32.mrb[0].mxu0
  %v215 = vadd.f32 %v147, %v214
  %v216 = vpop.f32.mrb[0].mxu0
  %217 = vdwg.mxu0
  %v218 = vsub.f32 0.0, %v215
  %v219 = vmul.f32 %v218, 1.442695
  %v220 = vpow.pop %v219
  %v221 = vadd.f32 %v220, 1.0
  %v222 = vrcp.pop %v221
  %v223 = vmul.f32 1.0, %v222
  %v224 = vld [vmem:[%s4] sm:$0xff]
  %v225 = vld [vmem:[%s4 + $0x8] sm:$0xff]
  %v226 = vld [vmem:[%s4 + $0x10] sm:$0xff]
  %v227 = vld [vmem:[%s4 + $0x18] sm:$0xff]
  %v228 = vld [vmem:[%s4 + $0x20] sm:$0xff]
  %v229 = vld [vmem:[%s4 + $0x28] sm:$0xff]
  %v230 = vld [vmem:[%s4 + $0x30] sm:$0xff]
  %v231 = vld [vmem:[%s4 + $0x38] sm:$0xff]
  %v232 = vld [vmem:[%s4 + $0x40] sm:$0xff]
  %v233 = vld [vmem:[%s4 + $0x48] sm:$0xff]
  %v234 = vld [vmem:[%s4 + $0x50] sm:$0xff]
  %v235 = vld [vmem:[%s4 + $0x58] sm:$0xff]
  %v236 = vld [vmem:[%s4 + $0x60] sm:$0xff]
  %v237 = vld [vmem:[%s4 + $0x68] sm:$0xff]
  %v238 = vld [vmem:[%s4 + $0x70] sm:$0xff]
  %v239 = vld [vmem:[%s4 + $0x78] sm:$0xff]
  %v240 = vlaneseq
  %v241 = vshrl.u32 %v240, 7
  %v242 = vsub.s32 0, %v241
  %v243 = vrot.slane %v25, %v242
  %244 = vmatprep.subr.mxu0 0.0
  %245 = vmatpush1.msra.mxu0 %v224
  %246 = vmatprep.subr.mxu0 0.0
  %247 = vmatpush1.msra.mxu0 %v225
  %248 = vmatprep.subr.mxu0 0.0
  %249 = vmatpush1.msra.mxu0 %v226
  %250 = vmatprep.subr.mxu0 0.0
  %251 = vmatpush1.msra.mxu0 %v227
  %252 = vmatprep.subr.mxu0 0.0
  %253 = vmatpush1.msra.mxu0 %v228
  %254 = vmatprep.subr.mxu0 0.0
  %255 = vmatpush1.msra.mxu0 %v229
  %256 = vmatprep.subr.mxu0 0.0
  %257 = vmatpush1.msra.mxu0 %v230
  %258 = vmatprep.subr.mxu0 0.0
  %259 = vmatpush1.msra.mxu0 %v231
  %260 = vmatprep.subr.mxu0 0.0
  %261 = vmatpush1.msra.mxu0 %v232
  %262 = vmatprep.subr.mxu0 0.0
  %263 = vmatpush1.msra.mxu0 %v233
  %264 = vmatprep.subr.mxu0 0.0
  %265 = vmatpush1.msra.mxu0 %v234
  %266 = vmatprep.subr.mxu0 0.0
  %267 = vmatpush1.msra.mxu0 %v235
  %268 = vmatprep.subr.mxu0 0.0
  %269 = vmatpush1.msra.mxu0 %v236
  %270 = vmatprep.subr.mxu0 0.0
  %271 = vmatpush1.msra.mxu0 %v237
  %272 = vmatprep.subr.mxu0 0.0
  %273 = vmatpush1.msra.mxu0 %v238
  %274 = vmatprep.subr.mxu0 0.0
  %275 = vmatpush1.msra.mxu0 %v239
  %276 = vmatprep.subr.mxu0 0.0
  %277 = vmatpush1.msra.mxu0 0.0
  %278 = vmatprep.subr.mxu0 0.0
  %279 = vmatpush1.msra.mxu0 0.0
  %280 = vmatprep.subr.mxu0 0.0
  %281 = vmatpush1.msra.mxu0 0.0
  %282 = vmatprep.subr.mxu0 0.0
  %283 = vmatpush1.msra.mxu0 0.0
  %284 = vmatprep.subr.mxu0 0.0
  %285 = vmatpush1.msra.mxu0 0.0
  %286 = vmatprep.subr.mxu0 0.0
  %287 = vmatpush1.msra.mxu0 0.0
  %288 = vmatprep.subr.mxu0 0.0
  %289 = vmatpush1.msra.mxu0 0.0
  %290 = vmatprep.subr.mxu0 0.0
  %291 = vmatpush1.msra.mxu0 0.0
  %292 = vmatprep.subr.mxu0 0.0
  %293 = vmatpush1.msra.mxu0 0.0
  %294 = vmatprep.subr.mxu0 0.0
  %295 = vmatpush1.msra.mxu0 0.0
  %296 = vmatprep.subr.mxu0 0.0
  %297 = vmatpush1.msra.mxu0 0.0
  %298 = vmatprep.subr.mxu0 0.0
  %299 = vmatpush1.msra.mxu0 0.0
  %300 = vmatprep.subr.mxu0 0.0
  %301 = vmatpush1.msra.mxu0 0.0
  %302 = vmatprep.subr.mxu0 0.0
  %303 = vmatpush1.msra.mxu0 0.0
  %304 = vmatprep.subr.mxu0 0.0
  %305 = vmatpush1.msra.mxu0 0.0
  %306 = vmatprep.subr.mxu0 0.0
  %307 = vmatpush1.msra.mxu0 0.0
  %308 = vmatprep.mubr.f32.mxu0 0.0
  %309 = vmatmul.mubr.f32.gmra.mrb[0].mxu0 %v223
  %v310 = vpop.f32.mrb[0].mxu0
  %v311 = vadd.f32 %v243, %v310
  %v312 = vpop.f32.mrb[0].mxu0
  %313 = vdwg.mxu0
  %314 = vmax.xlane.f32.xlu0 %v311
  %v315 = vpop.xlane.xlu0 %314
  %v316 = vsub.f32 %v311, %v315
  %v317 = vmul.f32 %v316, 1.442695
  %v318 = vpow.pop %v317
  %319 = vadd.xlane.f32.xlu0 %v318
  %v320 = vpop.xlane.xlu0 %319
  %v321 = vrcp.pop %v320
  %v322 = vmul.f32 %v318, %v321
  %v323 = vlaneseq
  %v324 = vshrl.u32 %v323, 7
  %v325 = vsub.s32 0, %v324
  %v326 = vrot.slane %v23, %v325
  %v327 = vmul.f32 %v326, %v322
  %v328 = vlaneseq
  %v329 = vshrl.u32 %v328, 7
  %v330 = vsub.s32 0, %v329
  %v331 = vrot.slane %v24, %v330
  %v332 = vadd.f32 %v327, %v331
  %v333 = vmax.f32 %v332, 0.0
  %334 = vadd.xlane.f32.xlu0 %v333
  %v335 = vpop.xlane.xlu0 %334
  %v336 = vrcp.pop %v335
  %v337 = vmul.f32 %v333, %v336
  %338 = vst [vmem:[%s5] sm:$0xff] %v337
  // Predicated region
  $region22: #{simple_period_dnn_forward.1} parent=0 // pred_check
    _
  $region23: #{simple_period_dnn_forward.1} parent=0 // pred_check_branch
    %340 = sbr.rel (0) target = $region25
  $region24: #{simple_period_dnn_forward.1} parent=0 // pred_region
    _
  $region25: #{simple_period_dnn_forward.1} parent=0 // pred_fallthru
    _
  // Predicated region
  $region26: #{simple_period_dnn_forward.1} parent=0 // pred_check
    _
  $region27: #{simple_period_dnn_forward.1} parent=0 // pred_check_branch
    %342 = sbr.rel (0) target = $region29
  $region28: #{simple_period_dnn_forward.1} parent=0 // pred_region
    _
  $region29: #{simple_period_dnn_forward.1} parent=0 // pred_fallthru
    _

</llo_original>
